<compile_context>
chip_gen: v6e
topology: v6e:2x2x1
jax: 0.10.0
libtpu: 0.0.40
codegen_flags: <defaults>
</compile_context>

<pallas_src>
import numpy as np
import jax
import jax.numpy as jnp
from jax.experimental import pallas as pl
from jax.experimental.pallas import tpu as pltpu


# ----------------------------------------------------------------------------
# Deterministic synthetic ERB filterbank (stand-in for ./erb.npy).
# Triangular band filters over the F frequency bins, shape (f_c, F).
# ----------------------------------------------------------------------------
def make_erb_fb(f_c: int, n_freq: int) -> np.ndarray:
    edges = np.geomspace(1.0, float(n_freq), num=f_c + 2) - 1.0  # (f_c+2,)
    fb = np.zeros((f_c, n_freq), dtype=np.float32)
    bins = np.arange(n_freq, dtype=np.float32)
    for i in range(f_c):
        lo, ce, hi = edges[i], edges[i + 1], edges[i + 2]
        rise = (bins - lo) / max(ce - lo, 1e-6)
        fall = (hi - bins) / max(hi - ce, 1e-6)
        tri = np.clip(np.minimum(rise, fall), 0.0, 1.0)
        s = tri.sum()
        fb[i] = tri / s if s > 0 else tri
    return fb


# ----------------------------------------------------------------------------
# Pallas kernel: one MXU matmul per M-tile: (tm, F) @ (F, f_c) -> (tm, f_c).
# F and f_c are small, so there is no K/N grid axis.
# ----------------------------------------------------------------------------
def _bm_kernel(x_ref, wt_ref, o_ref):
    o_ref[...] = jnp.dot(
        x_ref[...], wt_ref[...], preferred_element_type=jnp.float32
    ).astype(o_ref.dtype)


def _round_up(n: int, m: int) -> int:
    return ((n + m - 1) // m) * m


def bm_forward(x: jax.Array, erb_fb: jax.Array, *, tm: int = 1024) -> jax.Array:
    """Apply BM (y = x @ erb_fb.T) over the last axis of x via Pallas.

    x:      (..., F)   float32 or bfloat16
    erb_fb: (f_c, F)   float32 or bfloat16
    returns (..., f_c) float32
    """
    orig_shape = x.shape
    F = orig_shape[-1]
    f_c, F_w = erb_fb.shape
    assert F_w == F, (erb_fb.shape, F)

    x2 = x.reshape(-1, F)            # (M, F)
    M = x2.shape[0]
    wt = erb_fb.T                    # (F, f_c)

    # Tiny problems: pallas_call fixed overhead dwarfs the matmul.
    if M < 64:
        y = jnp.dot(x2, wt, preferred_element_type=jnp.float32)
        return y.reshape(*orig_shape[:-1], f_c)

    # Tile only over M; F (=K) and f_c (=N) stay whole and live in VMEM.
    # tm multiple of 32 satisfies sublane tiling for f32/bf16; ragged last
    # block (M % tm != 0) is masked by Pallas, no pad/slice copies needed.
    tm_eff = min(tm, _round_up(M, 32))
    grid = (pl.cdiv(M, tm_eff),)

    out = pl.pallas_call(
        _bm_kernel,
        out_shape=jax.ShapeDtypeStruct((M, f_c), jnp.float32),
        grid_spec=pltpu.PrefetchScalarGridSpec(
            num_scalar_prefetch=0,
            grid=grid,
            in_specs=[
                pl.BlockSpec((tm_eff, F), lambda i: (i, 0)),   # x tile
                pl.BlockSpec((F, f_c), lambda i: (0, 0)),      # invariant weight
            ],
            out_specs=pl.BlockSpec((tm_eff, f_c), lambda i: (i, 0)),
        ),
        compiler_params=pltpu.CompilerParams(
            dimension_semantics=("parallel",),   # M tiles shard across TCs (v7x)
        ),
    )(x2, wt)

    return out.reshape(*orig_shape[:-1], f_c)


# ----------------------------------------------------------------------------
# Demo / self-check
# ----------------------------------------------------------------------------
if __name__ == "__main__":
    # MTFAA-consistent shapes: fft_num=256 -> F=129 freq bins, f_c=32 ERB bands.
    fft_num = 256
    F = fft_num // 2 + 1     # 129
    f_c = 32

    erb_np = make_erb_fb(f_c, F)                 # (f_c, F), deterministic
    erb_fb = jnp.asarray(erb_np)

    key = jax.random.PRNGKey(0)
    k1, k2 = jax.random.split(key)

    # Case 1: small, single-tile path: (B, C, T, F) = (2, 4, 16, 129), M = 128.
    x_small = jax.random.normal(k1, (2, 4, 16, F), dtype=jnp.float32)
    y_small = jax.block_until_ready(bm_forward(x_small, erb_fb))
    ref_small = jnp.einsum("bctf,gf->bctg", x_small, erb_fb)
    assert y_small.shape == (2, 4, 16, f_c), y_small.shape
    np.testing.assert_allclose(
        np.asarray(y_small), np.asarray(ref_small), rtol=1e-5, atol=1e-5
    )

    # Case 2: multi-tile with ragged last block: M = 2*4*300 = 2400, tm = 1024
    # -> grid of 3 steps, last step masked (no pad / slice copies).
    x_large = jax.random.normal(k2, (2, 4, 300, F), dtype=jnp.float32)
    y_large = jax.block_until_ready(bm_forward(x_large, erb_fb))
    ref_large = jnp.einsum("bctf,gf->bctg", x_large, erb_fb)
    assert y_large.shape == (2, 4, 300, f_c), y_large.shape
    np.testing.assert_allclose(
        np.asarray(y_large), np.asarray(ref_large), rtol=1e-5, atol=1e-5
    )

    # Case 3: bf16 inputs (halves the dominant HBM read), f32 MXU accumulate.
    y_bf16 = jax.block_until_ready(
        bm_forward(x_large.astype(jnp.bfloat16), erb_fb.astype(jnp.bfloat16))
    )
    np.testing.assert_allclose(
        np.asarray(y_bf16), np.asarray(ref_large), rtol=3e-2, atol=3e-2
    )

    print("KERNEL_OK")
</pallas_src>

<mosaic_0001>
module attributes {stable_mosaic.version = 11 : i64} {
  func.func @_bm_kernel(%arg0: i32, %arg1: memref<128x129xf32, #tpu.memory_space<vmem>>, %arg2: memref<129x32xf32, #tpu.memory_space<vmem>>, %arg3: memref<128x32xf32, #tpu.memory_space<vmem>>) attributes {dimension_semantics = [#tpu.dimension_semantics<parallel>], iteration_bounds = array<i64: 1>, scalar_prefetch = 0 : i64, scratch_operands = 0 : i64, tpu.core_type = #tpu.core_type<tc>, window_params = [{transform_indices = @transform_0, window_bounds = array<i64: 128, 129>}, {pipeline_mode = #tpu.pipeline_mode<synchronous>, transform_indices = @transform_1, window_bounds = array<i64: 129, 32>}, {transform_indices = @transform_2, window_bounds = array<i64: 128, 32>}]} {
    %c0 = arith.constant 0 : index
    %c0_0 = arith.constant 0 : index
    %0 = vector.load %arg1[%c0, %c0_0] : memref<128x129xf32, #tpu.memory_space<vmem>>, vector<128x129xf32>
    %c0_1 = arith.constant 0 : index
    %c0_2 = arith.constant 0 : index
    %1 = vector.load %arg2[%c0_1, %c0_2] : memref<129x32xf32, #tpu.memory_space<vmem>>, vector<129x32xf32>
    %cst = arith.constant dense<0.000000e+00> : vector<128x32xf32>
    %2 = tpu.matmul %0, %1, %cst {dimension_numbers = #tpu.dot_dimension_numbers<[1], [0], [0], [1], [0, 0, 1, 1], [], []>} : vector<128x129xf32>, vector<129x32xf32>, vector<128x32xf32> -> vector<128x32xf32>
    %c0_3 = arith.constant 0 : index
    %c0_4 = arith.constant 0 : index
    %3 = vector.load %arg3[%c0_3, %c0_4] : memref<128x32xf32, #tpu.memory_space<vmem>>, vector<128x32xf32>
    tpu.vector_store %arg3[%c0_3, %c0_4], %2 {strides = array<i32>} : memref<128x32xf32, #tpu.memory_space<vmem>>, vector<128x32xf32>,
    return
  }
  func.func @transform_0(%arg0: i32) -> (i32, i32) {
    %c0_i32 = arith.constant 0 : i32
    %c0_i32_0 = arith.constant 0 : i32
    return %arg0, %c0_i32 : i32, i32
  }
  func.func @transform_1(%arg0: i32) -> (i32, i32) {
    %c0_i32 = arith.constant 0 : i32
    %c0_i32_0 = arith.constant 0 : i32
    %c0_i32_1 = arith.constant 0 : i32
    return %c0_i32, %c0_i32_0 : i32, i32
  }
  func.func @transform_2(%arg0: i32) -> (i32, i32) {
    %c0_i32 = arith.constant 0 : i32
    %c0_i32_0 = arith.constant 0 : i32
    return %arg0, %c0_i32 : i32, i32
  }
}

</mosaic_0001>

<llo_original>
// kernel: tpu_custom_call.1
$region0: #{tpu_custom_call.1}
  #allocation0 [shape = 'u32[]', space=smem, size = 0x4, offset = 0x4, fixed_abs, tag = 'smem constant byte address 0x4 - core index']
  #allocation1 [shape = 'u32[144,128]{1,0:T(1,128)}', space=vmem, size = 0x12000, scoped, tag = 'internal scratch']
  %s0 = inlined_call_operand.vmem [shape: f32[128,129], index: 0, kind: input, shape index: {}]
  %s1 = inlined_call_operand.vmem [shape: f32[129,32], index: 1, kind: input, shape index: {}]
  %s2 = inlined_call_operand.vmem [shape: f32[128,32], index: 2, kind: output, shape index: {}]
  %s3 = sld [smem:[#allocation0]]
  $region18: #{tpu_custom_call.1} parent=0
    _
  %s5 = ssub.s32 1, %s3
  %s6 = scalar_select 0, %s5, %s3
  // Predicated region
  $region2: #{tpu_custom_call.1} parent=0 // pred_check
    _
  $region3: #{tpu_custom_call.1} parent=0 // pred_check_branch
    %8 = sbr.rel (0) target = $region5
  $region4: #{tpu_custom_call.1} parent=0 // pred_region
    _
  $region5: #{tpu_custom_call.1} parent=0 // pred_fallthru
    _
  // Predicated region
  $region6: #{tpu_custom_call.1} parent=0 // pred_check
    _
  $region7: #{tpu_custom_call.1} parent=0 // pred_check_branch
    %10 = sbr.rel (0) target = $region9
  $region8: #{tpu_custom_call.1} parent=0 // pred_region
    _
  $region9: #{tpu_custom_call.1} parent=0 // pred_fallthru
    _
  %v11 = vld [vmem:[%s0] sm:$0xff]
  %v12 = vld [vmem:[%s0 + $0x8] sm:$0xff]
  %v13 = vld [vmem:[%s0 + $0x10] sm:$0xff]
  %v14 = vld [vmem:[%s0 + $0x18] sm:$0xff]
  %v15 = vld [vmem:[%s0 + $0x20] sm:$0xff]
  %v16 = vld [vmem:[%s0 + $0x28] sm:$0xff]
  %v17 = vld [vmem:[%s0 + $0x30] sm:$0xff]
  %v18 = vld [vmem:[%s0 + $0x38] sm:$0xff]
  %v19 = vld [vmem:[%s0 + $0x40] sm:$0xff]
  %v20 = vld [vmem:[%s0 + $0x48] sm:$0xff]
  %v21 = vld [vmem:[%s0 + $0x50] sm:$0xff]
  %v22 = vld [vmem:[%s0 + $0x58] sm:$0xff]
  %v23 = vld [vmem:[%s0 + $0x60] sm:$0xff]
  %v24 = vld [vmem:[%s0 + $0x68] sm:$0xff]
  %v25 = vld [vmem:[%s0 + $0x70] sm:$0xff]
  %v26 = vld [vmem:[%s0 + $0x78] sm:$0xff]
  %v27 = vld [vmem:[%s0 + $0x80] sm:$0xff]
  %v28 = vld [vmem:[%s0 + $0x88] sm:$0xff]
  %v29 = vld [vmem:[%s0 + $0x90] sm:$0xff]
  %v30 = vld [vmem:[%s0 + $0x98] sm:$0xff]
  %v31 = vld [vmem:[%s0 + $0xa0] sm:$0xff]
  %v32 = vld [vmem:[%s0 + $0xa8] sm:$0xff]
  %v33 = vld [vmem:[%s0 + $0xb0] sm:$0xff]
  %v34 = vld [vmem:[%s0 + $0xb8] sm:$0xff]
  %v35 = vld [vmem:[%s0 + $0xc0] sm:$0xff]
  %v36 = vld [vmem:[%s0 + $0xc8] sm:$0xff]
  %v37 = vld [vmem:[%s0 + $0xd0] sm:$0xff]
  %v38 = vld [vmem:[%s0 + $0xd8] sm:$0xff]
  %v39 = vld [vmem:[%s0 + $0xe0] sm:$0xff]
  %v40 = vld [vmem:[%s0 + $0xe8] sm:$0xff]
  %v41 = vld [vmem:[%s0 + $0xf0] sm:$0xff]
  %v42 = vld [vmem:[%s0 + $0xf8] sm:$0xff]
  %v43 = vld [vmem:[%s1] sm:$0xff]
  %v44 = vld [vmem:[%s1 + $0x8] sm:$0xff]
  %v45 = vld [vmem:[%s1 + $0x10] sm:$0xff]
  %v46 = vld [vmem:[%s1 + $0x18] sm:$0xff]
  %v47 = vld [vmem:[%s1 + $0x20] sm:$0xff]
  %v48 = vld [vmem:[%s1 + $0x28] sm:$0xff]
  %v49 = vld [vmem:[%s1 + $0x30] sm:$0xff]
  %v50 = vld [vmem:[%s1 + $0x38] sm:$0xff]
  %v51 = vld [vmem:[%s1 + $0x40] sm:$0xff]
  %v52 = vld [vmem:[%s1 + $0x48] sm:$0xff]
  %v53 = vld [vmem:[%s1 + $0x50] sm:$0xff]
  %v54 = vld [vmem:[%s1 + $0x58] sm:$0xff]
  %v55 = vld [vmem:[%s1 + $0x60] sm:$0xff]
  %v56 = vld [vmem:[%s1 + $0x68] sm:$0xff]
  %v57 = vld [vmem:[%s1 + $0x70] sm:$0xff]
  %v58 = vld [vmem:[%s1 + $0x78] sm:$0xff]
  %v59 = vld [vmem:[%s1 + $0x80] sm:$0x1]
  %vm60 = vcmask 7168
  %v62 = vsel %vm60, %v12, 0
  %v65 = vsel %vm60, %v14, 0
  %v68 = vsel %vm60, %v16, 0
  %v71 = vsel %vm60, %v18, 0
  %v74 = vsel %vm60, %v20, 0
  %v77 = vsel %vm60, %v22, 0
  %v80 = vsel %vm60, %v24, 0
  %v83 = vsel %vm60, %v26, 0
  %v86 = vsel %vm60, %v28, 0
  %v89 = vsel %vm60, %v30, 0
  %v92 = vsel %vm60, %v32, 0
  %v95 = vsel %vm60, %v34, 0
  %v98 = vsel %vm60, %v36, 0
  %v101 = vsel %vm60, %v38, 0
  %v104 = vsel %vm60, %v40, 0
  %v107 = vsel %vm60, %v42, 0
  %vm109 = vcmask 1040384
  %v111 = vsel %vm109, %v59, 0
  %113 = vmatprep.subr.mxu0 0.0
  %114 = vmatpush1.msra.mxu0 %v58
  %115 = vmatprep.subr.mxu0 0.0
  %116 = vmatpush1.msra.mxu0 %v57
  %117 = vmatprep.subr.mxu0 0.0
  %118 = vmatpush1.msra.mxu0 %v56
  %119 = vmatprep.subr.mxu0 0.0
  %120 = vmatpush1.msra.mxu0 %v55
  %121 = vmatprep.subr.mxu0 0.0
  %122 = vmatpush1.msra.mxu0 %v54
  %123 = vmatprep.subr.mxu0 0.0
  %124 = vmatpush1.msra.mxu0 %v53
  %125 = vmatprep.subr.mxu0 0.0
  %126 = vmatpush1.msra.mxu0 %v52
  %127 = vmatprep.subr.mxu0 0.0
  %128 = vmatpush1.msra.mxu0 %v51
  %129 = vmatprep.subr.mxu0 0.0
  %130 = vmatpush1.msra.mxu0 %v50
  %131 = vmatprep.subr.mxu0 0.0
  %132 = vmatpush1.msra.mxu0 %v49
  %133 = vmatprep.subr.mxu0 0.0
  %134 = vmatpush1.msra.mxu0 %v48
  %135 = vmatprep.subr.mxu0 0.0
  %136 = vmatpush1.msra.mxu0 %v47
  %137 = vmatprep.subr.mxu0 0.0
  %138 = vmatpush1.msra.mxu0 %v46
  %139 = vmatprep.subr.mxu0 0.0
  %140 = vmatpush1.msra.mxu0 %v45
  %141 = vmatprep.subr.mxu0 0.0
  %142 = vmatpush1.msra.mxu0 %v44
  %143 = vmatprep.subr.mxu0 0.0
  %144 = vmatpush1.msra.mxu0 %v43
  %145 = vmatprep.subr.mxu0 0.0
  %146 = vmatpush2.msra.mxu0 0.0
  %147 = vmatprep.subr.mxu0 0.0
  %148 = vmatpush2.msra.mxu0 0.0
  %149 = vmatprep.subr.mxu0 0.0
  %150 = vmatpush2.msra.mxu0 0.0
  %151 = vmatprep.subr.mxu0 0.0
  %152 = vmatpush2.msra.mxu0 0.0
  %153 = vmatprep.subr.mxu0 0.0
  %154 = vmatpush2.msra.mxu0 0.0
  %155 = vmatprep.subr.mxu0 0.0
  %156 = vmatpush2.msra.mxu0 0.0
  %157 = vmatprep.subr.mxu0 0.0
  %158 = vmatpush2.msra.mxu0 0.0
  %159 = vmatprep.subr.mxu0 0.0
  %160 = vmatpush2.msra.mxu0 0.0
  %161 = vmatprep.subr.mxu0 0.0
  %162 = vmatpush2.msra.mxu0 0.0
  %163 = vmatprep.subr.mxu0 0.0
  %164 = vmatpush2.msra.mxu0 0.0
  %165 = vmatprep.subr.mxu0 0.0
  %166 = vmatpush2.msra.mxu0 0.0
  %167 = vmatprep.subr.mxu0 0.0
  %168 = vmatpush2.msra.mxu0 0.0
  %169 = vmatprep.subr.mxu0 0.0
  %170 = vmatpush2.msra.mxu0 0.0
  %171 = vmatprep.subr.mxu0 0.0
  %172 = vmatpush2.msra.mxu0 0.0
  %173 = vmatprep.subr.mxu0 0.0
  %174 = vmatpush2.msra.mxu0 0.0
  %175 = vmatprep.subr.mxu0 0.0
  %176 = vmatpush2.msra.mxu0 %v111
  %177 = vmatprep.mubr.f32.mxu0 %v62
  %178 = vmatmul.mubr.f32.gmra.mxu0 %v11
  %v179 = vpop.f32.mrf.mxu0
  %v180 = vadd.f32 0.0, %v179
  %v181 = vpop.f32.mrf.mxu0
  %182 = vmatprep.mubr.f32.mxu0 %v65
  %183 = vmatmul.mubr.f32.gmra.mxu0 %v13
  %v184 = vpop.f32.mrf.mxu0
  %v185 = vadd.f32 0.0, %v184
  %v186 = vpop.f32.mrf.mxu0
  %187 = vmatprep.mubr.f32.mxu0 %v68
  %188 = vmatmul.mubr.f32.gmra.mxu0 %v15
  %v189 = vpop.f32.mrf.mxu0
  %v190 = vadd.f32 0.0, %v189
  %v191 = vpop.f32.mrf.mxu0
  %192 = vmatprep.mubr.f32.mxu0 %v71
  %193 = vmatmul.mubr.f32.gmra.mxu0 %v17
  %v194 = vpop.f32.mrf.mxu0
  %v195 = vadd.f32 0.0, %v194
  %v196 = vpop.f32.mrf.mxu0
  %197 = vmatprep.mubr.f32.mxu0 %v74
  %198 = vmatmul.mubr.f32.gmra.mxu0 %v19
  %v199 = vpop.f32.mrf.mxu0
  %v200 = vadd.f32 0.0, %v199
  %v201 = vpop.f32.mrf.mxu0
  %202 = vmatprep.mubr.f32.mxu0 %v77
  %203 = vmatmul.mubr.f32.gmra.mxu0 %v21
  %v204 = vpop.f32.mrf.mxu0
  %v205 = vadd.f32 0.0, %v204
  %v206 = vpop.f32.mrf.mxu0
  %207 = vmatprep.mubr.f32.mxu0 %v80
  %208 = vmatmul.mubr.f32.gmra.mxu0 %v23
  %v209 = vpop.f32.mrf.mxu0
  %v210 = vadd.f32 0.0, %v209
  %v211 = vpop.f32.mrf.mxu0
  %212 = vmatprep.mubr.f32.mxu0 %v83
  %213 = vmatmul.mubr.f32.gmra.mxu0 %v25
  %v214 = vpop.f32.mrf.mxu0
  %v215 = vadd.f32 0.0, %v214
  %v216 = vpop.f32.mrf.mxu0
  %217 = vmatprep.mubr.f32.mxu0 %v86
  %218 = vmatmul.mubr.f32.gmra.mxu0 %v27
  %v219 = vpop.f32.mrf.mxu0
  %v220 = vadd.f32 0.0, %v219
  %v221 = vpop.f32.mrf.mxu0
  %222 = vmatprep.mubr.f32.mxu0 %v89
  %223 = vmatmul.mubr.f32.gmra.mxu0 %v29
  %v224 = vpop.f32.mrf.mxu0
  %v225 = vadd.f32 0.0, %v224
  %v226 = vpop.f32.mrf.mxu0
  %227 = vmatprep.mubr.f32.mxu0 %v92
  %228 = vmatmul.mubr.f32.gmra.mxu0 %v31
  %v229 = vpop.f32.mrf.mxu0
  %v230 = vadd.f32 0.0, %v229
  %v231 = vpop.f32.mrf.mxu0
  %232 = vmatprep.mubr.f32.mxu0 %v95
  %233 = vmatmul.mubr.f32.gmra.mxu0 %v33
  %v234 = vpop.f32.mrf.mxu0
  %v235 = vadd.f32 0.0, %v234
  %v236 = vpop.f32.mrf.mxu0
  %237 = vmatprep.mubr.f32.mxu0 %v98
  %238 = vmatmul.mubr.f32.gmra.mxu0 %v35
  %v239 = vpop.f32.mrf.mxu0
  %v240 = vadd.f32 0.0, %v239
  %v241 = vpop.f32.mrf.mxu0
  %242 = vmatprep.mubr.f32.mxu0 %v101
  %243 = vmatmul.mubr.f32.gmra.mxu0 %v37
  %v244 = vpop.f32.mrf.mxu0
  %v245 = vadd.f32 0.0, %v244
  %v246 = vpop.f32.mrf.mxu0
  %247 = vmatprep.mubr.f32.mxu0 %v104
  %248 = vmatmul.mubr.f32.gmra.mxu0 %v39
  %v249 = vpop.f32.mrf.mxu0
  %v250 = vadd.f32 0.0, %v249
  %v251 = vpop.f32.mrf.mxu0
  %252 = vmatprep.mubr.f32.mxu0 %v107
  %253 = vmatmul.mubr.f32.gmra.mxu0 %v41
  %v254 = vpop.f32.mrf.mxu0
  %v255 = vadd.f32 0.0, %v254
  %v256 = vpop.f32.mrf.mxu0
  %257 = vdwg.mxu0
  %vm258 = vcmask 261120
  %259 = vst.msk [vmem:[%s2] sm:$0xff] %vm258, %v180
  %260 = vst.msk [vmem:[%s2 + $0x8] sm:$0xff] %vm258, %v185
  %261 = vst.msk [vmem:[%s2 + $0x10] sm:$0xff] %vm258, %v190
  %262 = vst.msk [vmem:[%s2 + $0x18] sm:$0xff] %vm258, %v195
  %263 = vst.msk [vmem:[%s2 + $0x20] sm:$0xff] %vm258, %v200
  %264 = vst.msk [vmem:[%s2 + $0x28] sm:$0xff] %vm258, %v205
  %265 = vst.msk [vmem:[%s2 + $0x30] sm:$0xff] %vm258, %v210
  %266 = vst.msk [vmem:[%s2 + $0x38] sm:$0xff] %vm258, %v215
  %267 = vst.msk [vmem:[%s2 + $0x40] sm:$0xff] %vm258, %v220
  %268 = vst.msk [vmem:[%s2 + $0x48] sm:$0xff] %vm258, %v225
  %269 = vst.msk [vmem:[%s2 + $0x50] sm:$0xff] %vm258, %v230
  %270 = vst.msk [vmem:[%s2 + $0x58] sm:$0xff] %vm258, %v235
  %271 = vst.msk [vmem:[%s2 + $0x60] sm:$0xff] %vm258, %v240
  %272 = vst.msk [vmem:[%s2 + $0x68] sm:$0xff] %vm258, %v245
  %273 = vst.msk [vmem:[%s2 + $0x70] sm:$0xff] %vm258, %v250
  %274 = vst.msk [vmem:[%s2 + $0x78] sm:$0xff] %vm258, %v255
  // Predicated region
  $region10: #{tpu_custom_call.1} parent=0 // pred_check
    _
  $region11: #{tpu_custom_call.1} parent=0 // pred_check_branch
    %276 = sbr.rel (0) target = $region13
  $region12: #{tpu_custom_call.1} parent=0 // pred_region
    _
  $region13: #{tpu_custom_call.1} parent=0 // pred_fallthru
    _
  // Predicated region
  $region14: #{tpu_custom_call.1} parent=0 // pred_check
    _
  $region15: #{tpu_custom_call.1} parent=0 // pred_check_branch
    %278 = sbr.rel (0) target = $region17
  $region16: #{tpu_custom_call.1} parent=0 // pred_region
    _
  $region17: #{tpu_custom_call.1} parent=0 // pred_fallthru
    _

</llo_original>
